<compile_context>
chip_gen: v7x
topology: tpu7x:2x2x1
jax: 0.10.0
libtpu: 0.0.40
codegen_flags: <defaults>
</compile_context>

<pallas_src>
import functools

import jax
import jax.numpy as jnp
import numpy as np
from jax.experimental import pallas as pl
from jax.experimental.pallas import tpu as pltpu


def _mha_kernel(q_ref, kv_ref, wq_ref, wkv_ref, bias_ref, hmask_ref, coll_ref,
                o_ref, *, hdim, scale):
    # q_ref   : (B*H, Dq)        block-diagonal-expanded query rows
    # kv_ref  : (B*S, Dk+Dv)     lane-concatenated keys and values
    # wq_ref  : (Dq, hdim)       block-diagonal per-head query weights
    # wkv_ref : (Dk+Dv, 2*hdim)  fused block-diagonal key/value weights
    # bias_ref: (B*H, B*S)       0 in-batch, -1e30 cross-batch
    # hmask_ref:(B*H, hdim)      1 on each head's own output lane block
    # coll_ref: (B, B*H)         head-rows -> batch-row collapse matrix
    # o_ref   : (B, hdim)
    f32 = jnp.float32

    # All-head query projection; rows are already head-isolated because the
    # wrapper expands the query block-diagonally over heads.
    q_heads = jnp.dot(q_ref[...], wq_ref[...], preferred_element_type=f32)   # (B*H, hdim)

    # Fused key + value projection (one MXU issue for both tensors).
    kvh = jnp.dot(kv_ref[...], wkv_ref[...], preferred_element_type=f32)     # (B*S, 2*hdim)
    kh = kvh[:, :hdim]                                                       # (B*S, hdim)
    vh = kvh[:, hdim:]                                                       # (B*S, hdim)

    # Scaled scores for all (batch, head) query rows against all (batch, seq)
    # key rows at once; contract the LAST axes of both operands (no k^T / XLU
    # transpose). Cross-batch entries are killed by the additive bias.
    scores = jax.lax.dot_general(
        q_heads, kh,
        dimension_numbers=(((1,), (1,)), ((), ())),
        preferred_element_type=f32)                                          # (B*H, B*S)
    scores = scores * scale + bias_ref[...]

    # Exact softmax over the key axis (eval-mode AttentionDropout == identity).
    scores = scores - jnp.max(scores, axis=-1, keepdims=True)
    e = jnp.exp(scores)
    alphas = e / jnp.sum(e, axis=-1, keepdims=True)                          # (B*H, B*S)

    # Weighted value reduction for all (batch, head) rows; keep each head's
    # own lane block, then collapse the H head rows of every batch into one
    # lane-dense output row with a tiny matmul.  Single (B, hdim) store.
    red = jnp.dot(alphas, vh, preferred_element_type=f32)                    # (B*H, hdim)
    out = jnp.dot(coll_ref[...], red * hmask_ref[...],
                  preferred_element_type=f32)                                # (B, hdim)
    o_ref[...] = out.astype(o_ref.dtype)


def _block_diag_heads(w):
    """(d_in_h, H, d_out_h) per-head weights -> (H*d_in_h, H*d_out_h) block-diag."""
    d_in_h, H, d_out_h = w.shape
    eye = jnp.eye(H, dtype=w.dtype)
    wbd = jnp.einsum('lhk,hg->hlgk', w, eye)        # (H, d_in_h, H, d_out_h)
    return wbd.reshape(H * d_in_h, H * d_out_h)


def multihead_attention_isolated(query, key, val, query_lin, key_lin, value_lin,
                                 numheads):
    B, querydim = query.shape
    _, S, keydim = key.shape
    valdim = val.shape[-1]
    H = numheads
    hd_h = query_lin.shape[-1]
    hdim = H * hd_h
    dq_h = querydim // H
    scale = float(1.0 / np.sqrt(hd_h))

    # ---- layout plumbing (plain JAX; reshapes and constants only) ----
    # Block-diagonal per-head projection weights.
    wq_bd = _block_diag_heads(query_lin)                          # (Dq, hdim)
    wk_bd = _block_diag_heads(key_lin)                            # (Dk, hdim)
    wv_bd = _block_diag_heads(value_lin)                          # (Dv, hdim)
    # Fused K/V weight so a single matmul projects both tensors.
    wkv_bd = jnp.zeros((keydim + valdim, 2 * hdim), wk_bd.dtype)
    wkv_bd = wkv_bd.at[:keydim, :hdim].set(wk_bd)
    wkv_bd = wkv_bd.at[keydim:, hdim:].set(wv_bd)
    kv_flat = jnp.concatenate(
        [key.reshape(B * S, keydim), val.reshape(B * S, valdim)], axis=-1)

    # Query rows expanded block-diagonally over heads: row b*H+h carries only
    # head h's input slice of query[b], so q_exp @ wq_bd is head-isolated.
    eye_h = jnp.eye(H, dtype=query.dtype)
    q_exp = jnp.einsum('bhl,hg->bhgl', query.reshape(B, H, dq_h), eye_h)
    q_exp = q_exp.reshape(B * H, H * dq_h)                        # (B*H, Dq)

    # Hoisted constants: cross-batch score bias, per-head output lane mask,
    # and the (B, B*H) head-rows -> batch-row collapse matrix.
    row_b = jnp.arange(B * H) // H
    col_b = jnp.arange(B * S) // S
    batch_bias = jnp.where(row_b[:, None] == col_b[None, :],
                           0.0, -1e30).astype(jnp.float32)        # (B*H, B*S)
    head_mask = (jnp.arange(H)[:, None]
                 == (jnp.arange(hdim)[None, :] // hd_h)).astype(jnp.float32)
    head_mask_rows = jnp.tile(head_mask, (B, 1))                  # (B*H, hdim)
    collapse = (jnp.arange(B)[:, None]
                == (jnp.arange(B * H)[None, :] // H)).astype(jnp.float32)  # (B, B*H)

    kernel = functools.partial(_mha_kernel, hdim=hdim, scale=scale)
    vmem = pltpu.MemorySpace.VMEM
    out = pl.pallas_call(
        kernel,
        out_shape=jax.ShapeDtypeStruct((B, hdim), query.dtype),
        # No grid: one kernel invocation; the whole (~25 KB) problem lives in
        # VMEM, so there is no tiling and no dimension_semantics to set.
        in_specs=[pl.BlockSpec(memory_space=vmem)] * 7,
        out_specs=pl.BlockSpec(memory_space=vmem),
    )(q_exp, kv_flat, wq_bd, wkv_bd, batch_bias, head_mask_rows, collapse)

    return out                                                    # (B, hdim)


def _kaiming_uniform(key, shape, dtype=jnp.float32):
    # matches torch.nn.init.kaiming_uniform_(w, a=sqrt(5)) bound: 1/sqrt(fan_in),
    # where fan_in = shape[1] * shape[2] for a 3-D tensor.
    fan_in = shape[1] * shape[2]
    bound = 1.0 / np.sqrt(fan_in)
    return jax.random.uniform(key, shape, dtype, minval=-bound, maxval=bound)


def _reference(query, key, val, query_lin, key_lin, value_lin, numheads):
    B, querydim = query.shape
    _, S, keydim = key.shape
    valdim = val.shape[-1]
    H = numheads
    hd_h = query_lin.shape[-1]
    queries = query.reshape(B, H, querydim // H)
    keys = key.reshape(B, S, H, keydim // H)
    q = jnp.einsum('bhl,lhk->bhk', queries, query_lin)
    k = jnp.einsum('bshl,lhk->bhsk', keys, key_lin)
    weights = jnp.einsum('bhk,bhsk->bhs', q, k) / np.sqrt(hd_h)
    alphas = jax.nn.softmax(weights, axis=-1)
    values = val.reshape(B, S, H, valdim // H).transpose(0, 2, 1, 3)
    values = jnp.einsum('bhsl,lhk->bhsk', values, value_lin)
    red = jnp.einsum('bhs,bhsk->bhk', alphas, values)
    return red.reshape(B, -1)


if __name__ == "__main__":
    # module config (small): querydim=keydim=valdim=hdim=32, numheads=4
    B, S = 2, 8
    querydim = keydim = valdim = hdim = 32
    numheads = 4
    dq_h = querydim // numheads
    dk_h = keydim // numheads
    dv_h = valdim // numheads
    hd_h = hdim // numheads

    root = jax.random.PRNGKey(0)
    kq, kk, kv, kwq, kwk, kwv = jax.random.split(root, 6)

    query = jax.random.normal(kq, (B, querydim), jnp.float32)
    key = jax.random.normal(kk, (B, S, keydim), jnp.float32)
    val = jax.random.normal(kv, (B, S, valdim), jnp.float32)

    query_lin = _kaiming_uniform(kwq, (dq_h, numheads, hd_h))
    key_lin = _kaiming_uniform(kwk, (dk_h, numheads, hd_h))
    value_lin = _kaiming_uniform(kwv, (dv_h, numheads, hd_h))

    out = multihead_attention_isolated(query, key, val, query_lin, key_lin,
                                       value_lin, numheads)
    out = jax.block_until_ready(out)

    ref = _reference(query, key, val, query_lin, key_lin, value_lin, numheads)
    # The kernel's softmax is exact (no approximate reciprocal); the remaining
    # tolerance only covers MXU / XLA default f32 matmul precision and the
    # different contraction grouping versus the einsum reference.
    np.testing.assert_allclose(np.asarray(out), np.asarray(ref),
                               rtol=2e-3, atol=2e-3)
    print("KERNEL_OK")
</pallas_src>

<mosaic_0001>
module attributes {stable_mosaic.version = 11 : i64} {
  func.func @_mha_kernel(%arg0: memref<8x32xf32, #tpu.memory_space<vmem>>, %arg1: memref<16x64xf32, #tpu.memory_space<vmem>>, %arg2: memref<32x32xf32, #tpu.memory_space<vmem>>, %arg3: memref<64x64xf32, #tpu.memory_space<vmem>>, %arg4: memref<8x16xf32, #tpu.memory_space<vmem>>, %arg5: memref<8x32xf32, #tpu.memory_space<vmem>>, %arg6: memref<2x8xf32, #tpu.memory_space<vmem>>, %arg7: memref<2x32xf32, #tpu.memory_space<vmem>>) attributes {dimension_semantics = [], scalar_prefetch = 0 : i64, scratch_operands = 0 : i64, tpu.core_type = #tpu.core_type<tc>} {
    %c0 = arith.constant 0 : index
    %c0_0 = arith.constant 0 : index
    %0 = vector.load %arg0[%c0, %c0_0] : memref<8x32xf32, #tpu.memory_space<vmem>>, vector<8x32xf32>
    %c0_1 = arith.constant 0 : index
    %c0_2 = arith.constant 0 : index
    %1 = vector.load %arg2[%c0_1, %c0_2] : memref<32x32xf32, #tpu.memory_space<vmem>>, vector<32x32xf32>
    %cst = arith.constant dense<0.000000e+00> : vector<8x32xf32>
    %2 = tpu.matmul %0, %1, %cst {dimension_numbers = #tpu.dot_dimension_numbers<[1], [0], [0], [1], [0, 0, 1, 1], [], []>} : vector<8x32xf32>, vector<32x32xf32>, vector<8x32xf32> -> vector<8x32xf32>
    %c0_3 = arith.constant 0 : index
    %c0_4 = arith.constant 0 : index
    %3 = vector.load %arg1[%c0_3, %c0_4] : memref<16x64xf32, #tpu.memory_space<vmem>>, vector<16x64xf32>
    %c0_5 = arith.constant 0 : index
    %c0_6 = arith.constant 0 : index
    %4 = vector.load %arg3[%c0_5, %c0_6] : memref<64x64xf32, #tpu.memory_space<vmem>>, vector<64x64xf32>
    %cst_7 = arith.constant dense<0.000000e+00> : vector<16x64xf32>
    %5 = tpu.matmul %3, %4, %cst_7 {dimension_numbers = #tpu.dot_dimension_numbers<[1], [0], [0], [1], [0, 0, 1, 1], [], []>} : vector<16x64xf32>, vector<64x64xf32>, vector<16x64xf32> -> vector<16x64xf32>
    %6 = vector.extract_strided_slice %5 {offsets = [0, 0], sizes = [16, 32], strides = [1, 1]} : vector<16x64xf32> to vector<16x32xf32>
    %7 = vector.extract_strided_slice %5 {offsets = [0, 32], sizes = [16, 32], strides = [1, 1]} : vector<16x64xf32> to vector<16x32xf32>
    %cst_8 = arith.constant dense<0.000000e+00> : vector<8x16xf32>
    %8 = tpu.matmul %2, %6, %cst_8 {dimension_numbers = #tpu.dot_dimension_numbers<[1], [1], [0], [0], [0, 0, 1, 0], [], []>} : vector<8x32xf32>, vector<16x32xf32>, vector<8x16xf32> -> vector<8x16xf32>
    %cst_9 = arith.constant 0.353553385 : f32
    %9 = vector.broadcast %cst_9 : f32 to vector<8x16xf32>
    %10 = arith.mulf %8, %9 : vector<8x16xf32>
    %c0_10 = arith.constant 0 : index
    %c0_11 = arith.constant 0 : index
    %11 = vector.load %arg4[%c0_10, %c0_11] : memref<8x16xf32, #tpu.memory_space<vmem>>, vector<8x16xf32>
    %12 = arith.addf %10, %11 : vector<8x16xf32>
    %cst_12 = arith.constant dense<0xFF800000> : vector<8xf32>
    %13 = vector.multi_reduction <maximumf>, %12, %cst_12 [1] : vector<8x16xf32> to vector<8xf32>
    %14 = vector.shape_cast %13 : vector<8xf32> to vector<8x1xf32>
    %15 = vector.broadcast %14 : vector<8x1xf32> to vector<8x16xf32>
    %16 = arith.subf %12, %15 : vector<8x16xf32>
    %17 = math.exp %16 : vector<8x16xf32>
    %cst_13 = arith.constant dense<0.000000e+00> : vector<8xf32>
    %18 = vector.multi_reduction <add>, %17, %cst_13 [1] : vector<8x16xf32> to vector<8xf32>
    %19 = vector.shape_cast %18 : vector<8xf32> to vector<8x1xf32>
    %20 = vector.broadcast %19 : vector<8x1xf32> to vector<8x16xf32>
    %21 = arith.divf %17, %20 : vector<8x16xf32>
    %cst_14 = arith.constant dense<0.000000e+00> : vector<8x32xf32>
    %22 = tpu.matmul %21, %7, %cst_14 {dimension_numbers = #tpu.dot_dimension_numbers<[1], [0], [0], [1], [0, 0, 1, 1], [], []>} : vector<8x16xf32>, vector<16x32xf32>, vector<8x32xf32> -> vector<8x32xf32>
    %c0_15 = arith.constant 0 : index
    %c0_16 = arith.constant 0 : index
    %23 = vector.load %arg6[%c0_15, %c0_16] : memref<2x8xf32, #tpu.memory_space<vmem>>, vector<2x8xf32>
    %c0_17 = arith.constant 0 : index
    %c0_18 = arith.constant 0 : index
    %24 = vector.load %arg5[%c0_17, %c0_18] : memref<8x32xf32, #tpu.memory_space<vmem>>, vector<8x32xf32>
    %25 = arith.mulf %22, %24 : vector<8x32xf32>
    %cst_19 = arith.constant dense<0.000000e+00> : vector<2x32xf32>
    %26 = tpu.matmul %23, %25, %cst_19 {dimension_numbers = #tpu.dot_dimension_numbers<[1], [0], [0], [1], [0, 0, 1, 1], [], []>} : vector<2x8xf32>, vector<8x32xf32>, vector<2x32xf32> -> vector<2x32xf32>
    %c0_20 = arith.constant 0 : index
    %c0_21 = arith.constant 0 : index
    %27 = vector.load %arg7[%c0_20, %c0_21] : memref<2x32xf32, #tpu.memory_space<vmem>>, vector<2x32xf32>
    tpu.vector_store %arg7[%c0_20, %c0_21], %26 {strides = array<i32>} : memref<2x32xf32, #tpu.memory_space<vmem>>, vector<2x32xf32>,
    return
  }
}

</mosaic_0001>

<llo_original>
// kernel: tpu_custom_call.1
$region0: #{tpu_custom_call.1}
  #allocation0 [shape = 'u32[]', space=smem, size = 0x4, offset = 0x4, fixed_abs, tag = 'smem constant byte address 0x4 - core index']
  #allocation1 [shape = 'u32[144,128]{1,0:T(1,128)}', space=vmem, size = 0x12000, scoped, tag = 'internal scratch']
  %s0 = inlined_call_operand.hbm [shape: f32[8,32], index: 0, kind: input, shape index: {}]
  %s1 = inlined_call_operand.hbm [shape: f32[16,64], index: 1, kind: input, shape index: {}]
  %s2 = inlined_call_operand.hbm [shape: f32[32,32], index: 2, kind: input, shape index: {}]
  %s3 = inlined_call_operand.hbm [shape: f32[64,64], index: 3, kind: input, shape index: {}]
  %s4 = inlined_call_operand.vmem [shape: f32[8,16], index: 4, kind: input, shape index: {}]
  %s5 = inlined_call_operand.vmem [shape: f32[8,32], index: 5, kind: input, shape index: {}]
  %s6 = inlined_call_operand.vmem [shape: f32[2,8], index: 6, kind: input, shape index: {}]
  %s7 = inlined_call_operand.hbm [shape: f32[2,32], index: 7, kind: output, shape index: {}]
  %s8 = sld [smem:[#allocation0]]
  $region54: #{tpu_custom_call.1} parent=0
    _
  %s10 = ssub.s32 1, %s8
  %s11 = scalar_select 0, %s10, %s8
  $region1: #{tpu_custom_call.1} parent=0
    #allocation2 [shape = 'u8[4096]{0}', space=vmem, size = 0x1000, scoped, tag = 'input window, operand 0, single buffered']
    #allocation3 [shape = 's32[1]{0}', space=sflag, size = 0x4, scoped, tag = 'scoped memory for tpu_custom_call.1']
    #allocation4 [shape = 's32[1]{0}', space=sflag, size = 0x4, scoped, tag = 'scoped memory for tpu_custom_call.1']
    #allocation5 [shape = 'u8[8192]{0}', space=vmem, size = 0x2000, scoped, tag = 'input window, operand 1, single buffered']
    #allocation6 [shape = 's32[1]{0}', space=sflag, size = 0x4, scoped, tag = 'scoped memory for tpu_custom_call.1']
    #allocation7 [shape = 'u8[16384]{0}', space=vmem, size = 0x4000, scoped, tag = 'input window, operand 2, single buffered']
    #allocation8 [shape = 'u8[32768]{0}', space=vmem, size = 0x8000, scoped, tag = 'input window, operand 3, single buffered']
    #allocation9 [shape = 's32[1]{0}', space=sflag, size = 0x4, scoped, tag = 'scoped memory for tpu_custom_call.1']
    #allocation10 [shape = 'u8[1024]{0}', space=vmem, size = 0x400, scoped, tag = 'output window, operand 0, single buffered']
    %12 = vsyncpa [#allocation3], 0
    %13 = vsyncpa [#allocation6], 0
    %14 = vsyncpa [#allocation9], 0
    %15 = vsyncpa [#allocation4], 0
    // Predicated region
    $region2: #{tpu_custom_call.1} parent=1 // pred_check
      _
    $region3: #{tpu_custom_call.1} parent=1 // pred_check_branch
      %17 = sbr.rel (0) target = $region5
    $region4: #{tpu_custom_call.1} parent=1 // pred_region
      %s19 = ssub.s32 128, 128
      %20 = vsyncadd [#allocation3], %s19
      %s22 = sshll.u32 [#allocation2], 4
      %s23 = int_to_ptr.vmem [resolvable:$true] %s22
      %25 = dma.hbm_to_vmem [thread:$0]  %s0, 128, %s23, [#allocation3]
    $region5: #{tpu_custom_call.1} parent=1 // pred_fallthru
      _
    // Predicated region
    $region6: #{tpu_custom_call.1} parent=1 // pred_check
      _
    $region7: #{tpu_custom_call.1} parent=1 // pred_check_branch
      %27 = sbr.rel (0) target = $region9
    $region8: #{tpu_custom_call.1} parent=1 // pred_region
      %s29 = ssub.s32 256, 256
      %30 = vsyncadd [#allocation6], %s29
      %s31 = sshll.u32 [#allocation5], 4
      %s32 = int_to_ptr.vmem [resolvable:$true] %s31
      %37 = dma.hbm_to_vmem [thread:$0]  %s1, 256, %s32, [#allocation6], 128, 128, 8
    $region9: #{tpu_custom_call.1} parent=1 // pred_fallthru
      _
    // Predicated region
    $region10: #{tpu_custom_call.1} parent=1 // pred_check
      _
    $region11: #{tpu_custom_call.1} parent=1 // pred_check_branch
      %39 = sbr.rel (0) target = $region13
    $region12: #{tpu_custom_call.1} parent=1 // pred_region
      %s41 = ssub.s32 512, 512
      %42 = vsyncadd [#allocation6], %s41
      %s43 = sshll.u32 [#allocation7], 4
      %s44 = int_to_ptr.vmem [resolvable:$true] %s43
      %49 = dma.hbm_to_vmem [thread:$0]  %s2, 512, %s44, [#allocation6], 128, 128, 8
    $region13: #{tpu_custom_call.1} parent=1 // pred_fallthru
      _
    // Predicated region
    $region14: #{tpu_custom_call.1} parent=1 // pred_check
      _
    $region15: #{tpu_custom_call.1} parent=1 // pred_check_branch
      %51 = sbr.rel (0) target = $region17
    $region16: #{tpu_custom_call.1} parent=1 // pred_region
      %s53 = ssub.s32 1024, 1024
      %54 = vsyncadd [#allocation9], %s53
      %s55 = sshll.u32 [#allocation8], 4
      %s56 = int_to_ptr.vmem [resolvable:$true] %s55
      %61 = dma.hbm_to_vmem [thread:$0]  %s3, 1024, %s56, [#allocation9], 128, 128, 8
    $region17: #{tpu_custom_call.1} parent=1 // pred_fallthru
      _
    // Predicated region
    $region18: #{tpu_custom_call.1} parent=1 // pred_check
      _
    $region19: #{tpu_custom_call.1} parent=1 // pred_check_branch
      %63 = sbr.rel (0) target = $region21
    $region20: #{tpu_custom_call.1} parent=1 // pred_region
      _
    $region21: #{tpu_custom_call.1} parent=1 // pred_fallthru
      _
    // Predicated region
    $region22: #{tpu_custom_call.1} parent=1 // pred_check
      _
    $region23: #{tpu_custom_call.1} parent=1 // pred_check_branch
      %65 = sbr.rel (0) target = $region25
    $region24: #{tpu_custom_call.1} parent=1 // pred_region
      _
    $region25: #{tpu_custom_call.1} parent=1 // pred_fallthru
      _
    // Predicated region
    $region26: #{tpu_custom_call.1} parent=1 // pred_check
      _
    $region27: #{tpu_custom_call.1} parent=1 // pred_check_branch
      %67 = sbr.rel (0) target = $region29
    $region28: #{tpu_custom_call.1} parent=1 // pred_region
      _
    $region29: #{tpu_custom_call.1} parent=1 // pred_fallthru
      _
    // Predicated region
    $region30: #{tpu_custom_call.1} parent=1 // pred_check
      _
    $region31: #{tpu_custom_call.1} parent=1 // pred_check_branch
      %69 = sbr.rel (0) target = $region33
    $region32: #{tpu_custom_call.1} parent=1 // pred_region
      %70 = dma.done [#allocation3], 128
    $region33: #{tpu_custom_call.1} parent=1 // pred_fallthru
      _
    // Predicated region
    $region34: #{tpu_custom_call.1} parent=1 // pred_check
      _
    $region35: #{tpu_custom_call.1} parent=1 // pred_check_branch
      %72 = sbr.rel (0) target = $region37
    $region36: #{tpu_custom_call.1} parent=1 // pred_region
      %73 = dma.done [#allocation6], 256
    $region37: #{tpu_custom_call.1} parent=1 // pred_fallthru
      _
    // Predicated region
    $region38: #{tpu_custom_call.1} parent=1 // pred_check
      _
    $region39: #{tpu_custom_call.1} parent=1 // pred_check_branch
      %75 = sbr.rel (0) target = $region41
    $region40: #{tpu_custom_call.1} parent=1 // pred_region
      %76 = dma.done [#allocation6], 512
    $region41: #{tpu_custom_call.1} parent=1 // pred_fallthru
      _
    // Predicated region
    $region42: #{tpu_custom_call.1} parent=1 // pred_check
      _
    $region43: #{tpu_custom_call.1} parent=1 // pred_check_branch
      %78 = sbr.rel (0) target = $region45
    $region44: #{tpu_custom_call.1} parent=1 // pred_region
      %79 = dma.done [#allocation9], 1024
    $region45: #{tpu_custom_call.1} parent=1 // pred_fallthru
      _
    %v80 = vld [vmem:[#allocation2] sm:$0xff]
    %v81 = vld [vmem:[#allocation7] sm:$0xff]
    %v82 = vld [vmem:[#allocation7 + $0x8] sm:$0xff]
    %v83 = vld [vmem:[#allocation7 + $0x10] sm:$0xff]
    %v84 = vld [vmem:[#allocation7 + $0x18] sm:$0xff]
    %vm85 = vcmask 261120
    %v87 = vsel %vm85, %v80, 0
    %89 = vmatprep.subr.mxu0 0.0
    %90 = vmatpush1.msra.mxu0 %v81
    %91 = vmatprep.subr.mxu0 0.0
    %92 = vmatpush1.msra.mxu0 %v82
    %93 = vmatprep.subr.mxu0 0.0
    %94 = vmatpush1.msra.mxu0 %v83
    %95 = vmatprep.subr.mxu0 0.0
    %96 = vmatpush1.msra.mxu0 %v84
    %97 = vmatprep.subr.mxu0 0.0
    %98 = vmatpush1.msra.mxu0 0.0
    %99 = vmatprep.subr.mxu0 0.0
    %100 = vmatpush1.msra.mxu0 0.0
    %101 = vmatprep.subr.mxu0 0.0
    %102 = vmatpush1.msra.mxu0 0.0
    %103 = vmatprep.subr.mxu0 0.0
    %104 = vmatpush1.msra.mxu0 0.0
    %105 = vmatprep.subr.mxu0 0.0
    %106 = vmatpush1.msra.mxu0 0.0
    %107 = vmatprep.subr.mxu0 0.0
    %108 = vmatpush1.msra.mxu0 0.0
    %109 = vmatprep.subr.mxu0 0.0
    %110 = vmatpush1.msra.mxu0 0.0
    %111 = vmatprep.subr.mxu0 0.0
    %112 = vmatpush1.msra.mxu0 0.0
    %113 = vmatprep.subr.mxu0 0.0
    %114 = vmatpush1.msra.mxu0 0.0
    %115 = vmatprep.subr.mxu0 0.0
    %116 = vmatpush1.msra.mxu0 0.0
    %117 = vmatprep.subr.mxu0 0.0
    %118 = vmatpush1.msra.mxu0 0.0
    %119 = vmatprep.subr.mxu0 0.0
    %120 = vmatpush1.msra.mxu0 0.0
    %121 = vmatprep.subr.mxu0 0.0
    %122 = vmatpush1.msra.mxu0 0.0
    %123 = vmatprep.subr.mxu0 0.0
    %124 = vmatpush1.msra.mxu0 0.0
    %125 = vmatprep.subr.mxu0 0.0
    %126 = vmatpush1.msra.mxu0 0.0
    %127 = vmatprep.subr.mxu0 0.0
    %128 = vmatpush1.msra.mxu0 0.0
    %129 = vmatprep.subr.mxu0 0.0
    %130 = vmatpush1.msra.mxu0 0.0
    %131 = vmatprep.subr.mxu0 0.0
    %132 = vmatpush1.msra.mxu0 0.0
    %133 = vmatprep.subr.mxu0 0.0
    %134 = vmatpush1.msra.mxu0 0.0
    %135 = vmatprep.subr.mxu0 0.0
    %136 = vmatpush1.msra.mxu0 0.0
    %137 = vmatprep.subr.mxu0 0.0
    %138 = vmatpush1.msra.mxu0 0.0
    %139 = vmatprep.subr.mxu0 0.0
    %140 = vmatpush1.msra.mxu0 0.0
    %141 = vmatprep.subr.mxu0 0.0
    %142 = vmatpush1.msra.mxu0 0.0
    %143 = vmatprep.subr.mxu0 0.0
    %144 = vmatpush1.msra.mxu0 0.0
    %145 = vmatprep.subr.mxu0 0.0
    %146 = vmatpush1.msra.mxu0 0.0
    %147 = vmatprep.subr.mxu0 0.0
    %148 = vmatpush1.msra.mxu0 0.0
    %149 = vmatprep.subr.mxu0 0.0
    %150 = vmatpush1.msra.mxu0 0.0
    %151 = vmatprep.subr.mxu0 0.0
    %152 = vmatpush1.msra.mxu0 0.0
    %153 = vmatprep.mubr.f32.mxu0 0.0
    %154 = vmatmul.mubr.f32.gmra.mrb[0].mxu0 %v87
    %v155 = vpop.f32.mrb[0].mxu0
    %v156 = vadd.f32 0.0, %v155
    %v157 = vpop.f32.mrb[0].mxu0
    %158 = vdwg.mxu0
    %v159 = vld [vmem:[#allocation5] sm:$0xff]
    %v160 = vld [vmem:[#allocation5 + $0x8] sm:$0xff]
    %v161 = vld [vmem:[#allocation8] sm:$0xff]
    %v162 = vld [vmem:[#allocation8 + $0x8] sm:$0xff]
    %v163 = vld [vmem:[#allocation8 + $0x10] sm:$0xff]
    %v164 = vld [vmem:[#allocation8 + $0x18] sm:$0xff]
    %v165 = vld [vmem:[#allocation8 + $0x20] sm:$0xff]
    %v166 = vld [vmem:[#allocation8 + $0x28] sm:$0xff]
    %v167 = vld [vmem:[#allocation8 + $0x30] sm:$0xff]
    %v168 = vld [vmem:[#allocation8 + $0x38] sm:$0xff]
    %vm169 = vcmask 523264
    %v171 = vsel %vm169, %v159, 0
    %v174 = vsel %vm169, %v160, 0
    %176 = vmatprep.subr.mxu0 0.0
    %177 = vmatpush1.msra.mxu0 %v161
    %178 = vmatprep.subr.mxu0 0.0
    %179 = vmatpush1.msra.mxu0 %v162
    %180 = vmatprep.subr.mxu0 0.0
    %181 = vmatpush1.msra.mxu0 %v163
    %182 = vmatprep.subr.mxu0 0.0
    %183 = vmatpush1.msra.mxu0 %v164
    %184 = vmatprep.subr.mxu0 0.0
    %185 = vmatpush1.msra.mxu0 %v165
    %186 = vmatprep.subr.mxu0 0.0
    %187 = vmatpush1.msra.mxu0 %v166
    %188 = vmatprep.subr.mxu0 0.0
    %189 = vmatpush1.msra.mxu0 %v167
    %190 = vmatprep.subr.mxu0 0.0
    %191 = vmatpush1.msra.mxu0 %v168
    %192 = vmatprep.subr.mxu0 0.0
    %193 = vmatpush1.msra.mxu0 0.0
    %194 = vmatprep.subr.mxu0 0.0
    %195 = vmatpush1.msra.mxu0 0.0
    %196 = vmatprep.subr.mxu0 0.0
    %197 = vmatpush1.msra.mxu0 0.0
    %198 = vmatprep.subr.mxu0 0.0
    %199 = vmatpush1.msra.mxu0 0.0
    %200 = vmatprep.subr.mxu0 0.0
    %201 = vmatpush1.msra.mxu0 0.0
    %202 = vmatprep.subr.mxu0 0.0
    %203 = vmatpush1.msra.mxu0 0.0
    %204 = vmatprep.subr.mxu0 0.0
    %205 = vmatpush1.msra.mxu0 0.0
    %206 = vmatprep.subr.mxu0 0.0
    %207 = vmatpush1.msra.mxu0 0.0
    %208 = vmatprep.subr.mxu0 0.0
    %209 = vmatpush1.msra.mxu0 0.0
    %210 = vmatprep.subr.mxu0 0.0
    %211 = vmatpush1.msra.mxu0 0.0
    %212 = vmatprep.subr.mxu0 0.0
    %213 = vmatpush1.msra.mxu0 0.0
    %214 = vmatprep.subr.mxu0 0.0
    %215 = vmatpush1.msra.mxu0 0.0
    %216 = vmatprep.subr.mxu0 0.0
    %217 = vmatpush1.msra.mxu0 0.0
    %218 = vmatprep.subr.mxu0 0.0
    %219 = vmatpush1.msra.mxu0 0.0
    %220 = vmatprep.subr.mxu0 0.0
    %221 = vmatpush1.msra.mxu0 0.0
    %222 = vmatprep.subr.mxu0 0.0
    %223 = vmatpush1.msra.mxu0 0.0
    %224 = vmatprep.subr.mxu0 0.0
    %225 = vmatpush1.msra.mxu0 0.0
    %226 = vmatprep.subr.mxu0 0.0
    %227 = vmatpush1.msra.mxu0 0.0
    %228 = vmatprep.subr.mxu0 0.0
    %229 = vmatpush1.msra.mxu0 0.0
    %230 = vmatprep.subr.mxu0 0.0
    %231 = vmatpush1.msra.mxu0 0.0
    %232 = vmatprep.subr.mxu0 0.0
    %233 = vmatpush1.msra.mxu0 0.0
    %234 = vmatprep.subr.mxu0 0.0
    %235 = vmatpush1.msra.mxu0 0.0
    %236 = vmatprep.subr.mxu0 0.0
    %237 = vmatpush1.msra.mxu0 0.0
    %238 = vmatprep.subr.mxu0 0.0
    %239 = vmatpush1.msra.mxu0 0.0
    %240 = vmatprep.mubr.f32.mxu0 0.0
    %241 = vmatmul.mubr.f32.gmra.mrb[0].mxu0 %v171
    %v242 = vpop.f32.mrb[0].mxu0
    %v243 = vadd.f32 0.0, %v242
    %v244 = vpop.f32.mrb[0].mxu0
    %245 = vmatprep.mubr.f32.mxu0 0.0
    %246 = vmatmul.mubr.f32.gmra.mrb[0].mxu0 %v174
    %v247 = vpop.f32.mrb[0].mxu0
    %v248 = vadd.f32 0.0, %v247
    %v249 = vpop.f32.mrb[0].mxu0
    %250 = vdwg.mxu0
    %v252 = vsel %vm85, %v156, 0
    %v255 = vsel %vm85, %v243, 0
    %v258 = vsel %vm85, %v248, 0
    %260 = vmatprep.subr.mxu0 0.0
    %261 = vmatpush1.xpose.msra.mxu0 %v255
    %262 = vmatprep.subr.mxu0 0.0
    %263 = vmatpush1.xpose.msra.mxu0 %v258
    %264 = vmatprep.subr.mxu0 0.0
    %265 = vmatpush1.xpose.msra.mxu0 0.0
    %266 = vmatprep.subr.mxu0 0.0
    %267 = vmatpush1.xpose.msra.mxu0 0.0
    %268 = vmatprep.subr.mxu0 0.0
    %269 = vmatpush1.xpose.msra.mxu0 0.0
    %270 = vmatprep.subr.mxu0 0.0
    %271 = vmatpush1.xpose.msra.mxu0 0.0
    %272 = vmatprep.subr.mxu0 0.0
    %273 = vmatpush1.xpose.msra.mxu0 0.0
    %274 = vmatprep.subr.mxu0 0.0
    %275 = vmatpush1.xpose.msra.mxu0 0.0
    %276 = vmatprep.subr.mxu0 0.0
    %277 = vmatpush1.xpose.msra.mxu0 0.0
    %278 = vmatprep.subr.mxu0 0.0
    %279 = vmatpush1.xpose.msra.mxu0 0.0
    %280 = vmatprep.subr.mxu0 0.0
    %281 = vmatpush1.xpose.msra.mxu0 0.0
    %282 = vmatprep.subr.mxu0 0.0
    %283 = vmatpush1.xpose.msra.mxu0 0.0
    %284 = vmatprep.subr.mxu0 0.0
    %285 = vmatpush1.xpose.msra.mxu0 0.0
    %286 = vmatprep.subr.mxu0 0.0
    %287 = vmatpush1.xpose.msra.mxu0 0.0
    %288 = vmatprep.subr.mxu0 0.0
    %289 = vmatpush1.xpose.msra.mxu0 0.0
    %290 = vmatprep.subr.mxu0 0.0
    %291 = vmatpush1.xpose.msra.mxu0 0.0
    %292 = vmatprep.subr.mxu0 0.0
    %293 = vmatpush1.xpose.msra.mxu0 0.0
    %294 = vmatprep.subr.mxu0 0.0
    %295 = vmatpush1.xpose.msra.mxu0 0.0
    %296 = vmatprep.subr.mxu0 0.0
    %297 = vmatpush1.xpose.msra.mxu0 0.0
    %298 = vmatprep.subr.mxu0 0.0
    %299 = vmatpush1.xpose.msra.mxu0 0.0
    %300 = vmatprep.subr.mxu0 0.0
    %301 = vmatpush1.xpose.msra.mxu0 0.0
    %302 = vmatprep.subr.mxu0 0.0
    %303 = vmatpush1.xpose.msra.mxu0 0.0
    %304 = vmatprep.subr.mxu0 0.0
    %305 = vmatpush1.xpose.msra.mxu0 0.0
    %306 = vmatprep.subr.mxu0 0.0
    %307 = vmatpush1.xpose.msra.mxu0 0.0
    %308 = vmatprep.subr.mxu0 0.0
    %309 = vmatpush1.xpose.msra.mxu0 0.0
    %310 = vmatprep.subr.mxu0 0.0
    %311 = vmatpush1.xpose.msra.mxu0 0.0
    %312 = vmatprep.subr.mxu0 0.0
    %313 = vmatpush1.xpose.msra.mxu0 0.0
    %314 = vmatprep.subr.mxu0 0.0
    %315 = vmatpush1.xpose.msra.mxu0 0.0
    %316 = vmatprep.subr.mxu0 0.0
    %317 = vmatpush1.xpose.msra.mxu0 0.0
    %318 = vmatprep.subr.mxu0 0.0
    %319 = vmatpush1.xpose.msra.mxu0 0.0
    %320 = vmatprep.subr.mxu0 0.0
    %321 = vmatpush1.xpose.msra.mxu0 0.0
    %322 = vmatprep.subr.mxu0 0.0
    %323 = vmatpush1.xpose.msra.mxu0 0.0
    %324 = vmatprep.mubr.f32.mxu0 0.0
    %325 = vmatmul.mubr.f32.gmra.mrb[0].mxu0 %v252
    %v326 = vpop.f32.mrb[0].mxu0
    %v327 = vadd.f32 0.0, %v326
    %v328 = vpop.f32.mrb[0].mxu0
    %329 = vdwg.mxu0
    %v330 = vmul.f32 %v327, 0.35355338
    %v331 = vld [vmem:[%s4] sm:$0xff]
    %v332 = vadd.f32 %v330, %v331
    %vm333 = vcmask 130048
    %v334 = vsel %vm333, %v332, -inf
    %335 = vmax.xlane.f32.xlu0 %v334
    %v336 = vpop.xlane.xlu0 %335
    %v337 = vsub.f32 %v332, %v336
    %v338 = vmul.f32 %v337, 1.442695
    %v339 = vpow.pop %v338
    %v340 = vsel %vm333, %v339, 0.0
    %341 = vadd.xlane.f32.xlu0 %v340
    %v342 = vpop.xlane.xlu0 %341
    %v343 = vrcp.pop %v342
    %v344 = vmul.f32 %v339, %v343
    %345 = vrot.lane.b32.xlu0 %v243, 96
    %v346 = vpop.permute.xlu0 %345
    %347 = vrot.lane.b32.xlu0 %v248, 96
    %v348 = vpop.permute.xlu0 %347
    %v352 = vsel %vm333, %v344, 0
    %354 = vmatprep.subr.mxu0 0.0
    %355 = vmatpush1.msra.mxu0 %v346
    %356 = vmatprep.subr.mxu0 0.0
    %357 = vmatpush1.msra.mxu0 %v348
    %358 = vmatprep.subr.mxu0 0.0
    %359 = vmatpush1.msra.mxu0 0.0
    %360 = vmatprep.subr.mxu0 0.0
    %361 = vmatpush1.msra.mxu0 0.0
    %362 = vmatprep.subr.mxu0 0.0
    %363 = vmatpush1.msra.mxu0 0.0
    %364 = vmatprep.subr.mxu0 0.0
    %365 = vmatpush1.msra.mxu0 0.0
    %366 = vmatprep.subr.mxu0 0.0
    %367 = vmatpush1.msra.mxu0 0.0
    %368 = vmatprep.subr.mxu0 0.0
    %369 = vmatpush1.msra.mxu0 0.0
    %370 = vmatprep.subr.mxu0 0.0
    %371 = vmatpush1.msra.mxu0 0.0
    %372 = vmatprep.subr.mxu0 0.0
    %373 = vmatpush1.msra.mxu0 0.0
    %374 = vmatprep.subr.mxu0 0.0
    %375 = vmatpush1.msra.mxu0 0.0
    %376 = vmatprep.subr.mxu0 0.0
    %377 = vmatpush1.msra.mxu0 0.0
    %378 = vmatprep.subr.mxu0 0.0
    %379 = vmatpush1.msra.mxu0 0.0
    %380 = vmatprep.subr.mxu0 0.0
    %381 = vmatpush1.msra.mxu0 0.0
    %382 = vmatprep.subr.mxu0 0.0
    %383 = vmatpush1.msra.mxu0 0.0
    %384 = vmatprep.subr.mxu0 0.0
    %385 = vmatpush1.msra.mxu0 0.0
    %386 = vmatprep.subr.mxu0 0.0
    %387 = vmatpush1.msra.mxu0 0.0
    %388 = vmatprep.subr.mxu0 0.0
    %389 = vmatpush1.msra.mxu0 0.0
    %390 = vmatprep.subr.mxu0 0.0
    %391 = vmatpush1.msra.mxu0 0.0
    %392 = vmatprep.subr.mxu0 0.0
    %393 = vmatpush1.msra.mxu0 0.0
    %394 = vmatprep.subr.mxu0 0.0
    %395 = vmatpush1.msra.mxu0 0.0
    %396 = vmatprep.subr.mxu0 0.0
    %397 = vmatpush1.msra.mxu0 0.0
    %398 = vmatprep.subr.mxu0 0.0
    %399 = vmatpush1.msra.mxu0 0.0
    %400 = vmatprep.subr.mxu0 0.0
    %401 = vmatpush1.msra.mxu0 0.0
    %402 = vmatprep.subr.mxu0 0.0
    %403 = vmatpush1.msra.mxu0 0.0
    %404 = vmatprep.subr.mxu0 0.0
    %405 = vmatpush1.msra.mxu0 0.0
    %406 = vmatprep.subr.mxu0 0.0
    %407 = vmatpush1.msra.mxu0 0.0
    %408 = vmatprep.subr.mxu0 0.0
    %409 = vmatpush1.msra.mxu0 0.0
    %410 = vmatprep.subr.mxu0 0.0
    %411 = vmatpush1.msra.mxu0 0.0
    %412 = vmatprep.subr.mxu0 0.0
    %413 = vmatpush1.msra.mxu0 0.0
    %414 = vmatprep.subr.mxu0 0.0
    %415 = vmatpush1.msra.mxu0 0.0
    %416 = vmatprep.subr.mxu0 0.0
    %417 = vmatpush1.msra.mxu0 0.0
    %418 = vmatprep.mubr.f32.mxu0 0.0
    %419 = vmatmul.mubr.f32.gmra.mrb[0].mxu0 %v352
    %v420 = vpop.f32.mrb[0].mxu0
    %v421 = vadd.f32 0.0, %v420
    %v422 = vpop.f32.mrb[0].mxu0
    %423 = vdwg.mxu0
    %v424 = vld [vmem:[%s6] sm:$0x3]
    %v425 = vld [vmem:[%s5] sm:$0xff]
    %v426 = vmul.f32 %v421, %v425
    %vm427 = vcmask 64512
    %v429 = vsel %vm427, %v424, 0
    %431 = vmatprep.subr.mxu0 0.0
    %432 = vmatpush1.msra.mxu0 %v426
    %433 = vmatprep.subr.mxu0 0.0
    %434 = vmatpush1.msra.mxu0 0.0
    %435 = vmatprep.subr.mxu0 0.0
    %436 = vmatpush1.msra.mxu0 0.0
    %437 = vmatprep.subr.mxu0 0.0
    %438 = vmatpush1.msra.mxu0 0.0
    %439 = vmatprep.subr.mxu0 0.0
    %440 = vmatpush1.msra.mxu0 0.0
    %441 = vmatprep.subr.mxu0 0.0
    %442 = vmatpush1.msra.mxu0 0.0
    %443 = vmatprep.subr.mxu0 0.0
    %444 = vmatpush1.msra.mxu0 0.0
    %445 = vmatprep.subr.mxu0 0.0
    %446 = vmatpush1.msra.mxu0 0.0
    %447 = vmatprep.subr.mxu0 0.0
    %448 = vmatpush1.msra.mxu0 0.0
    %449 = vmatprep.subr.mxu0 0.0
    %450 = vmatpush1.msra.mxu0 0.0
    %451 = vmatprep.subr.mxu0 0.0
    %452 = vmatpush1.msra.mxu0 0.0
    %453 = vmatprep.subr.mxu0 0.0
    %454 = vmatpush1.msra.mxu0 0.0
    %455 = vmatprep.subr.mxu0 0.0
    %456 = vmatpush1.msra.mxu0 0.0
    %457 = vmatprep.subr.mxu0 0.0
    %458 = vmatpush1.msra.mxu0 0.0
    %459 = vmatprep.subr.mxu0 0.0
    %460 = vmatpush1.msra.mxu0 0.0
    %461 = vmatprep.subr.mxu0 0.0
    %462 = vmatpush1.msra.mxu0 0.0
    %463 = vmatprep.subr.mxu0 0.0
    %464 = vmatpush1.msra.mxu0 0.0
    %465 = vmatprep.subr.mxu0 0.0
    %466 = vmatpush1.msra.mxu0 0.0
    %467 = vmatprep.subr.mxu0 0.0
    %468 = vmatpush1.msra.mxu0 0.0
    %469 = vmatprep.subr.mxu0 0.0
    %470 = vmatpush1.msra.mxu0 0.0
    %471 = vmatprep.subr.mxu0 0.0
    %472 = vmatpush1.msra.mxu0 0.0
    %473 = vmatprep.subr.mxu0 0.0
    %474 = vmatpush1.msra.mxu0 0.0
    %475 = vmatprep.subr.mxu0 0.0
    %476 = vmatpush1.msra.mxu0 0.0
    %477 = vmatprep.subr.mxu0 0.0
    %478 = vmatpush1.msra.mxu0 0.0
    %479 = vmatprep.subr.mxu0 0.0
    %480 = vmatpush1.msra.mxu0 0.0
    %481 = vmatprep.subr.mxu0 0.0
    %482 = vmatpush1.msra.mxu0 0.0
    %483 = vmatprep.subr.mxu0 0.0
    %484 = vmatpush1.msra.mxu0 0.0
    %485 = vmatprep.subr.mxu0 0.0
    %486 = vmatpush1.msra.mxu0 0.0
    %487 = vmatprep.subr.mxu0 0.0
    %488 = vmatpush1.msra.mxu0 0.0
    %489 = vmatprep.subr.mxu0 0.0
    %490 = vmatpush1.msra.mxu0 0.0
    %491 = vmatprep.subr.mxu0 0.0
    %492 = vmatpush1.msra.mxu0 0.0
    %493 = vmatprep.subr.mxu0 0.0
    %494 = vmatpush1.msra.mxu0 0.0
    %495 = vmatprep.mubr.f32.mxu0 0.0
    %496 = vmatmul.mubr.f32.gmra.mrb[0].mxu0 %v429
    %v497 = vpop.f32.mrb[0].mxu0
    %v498 = vadd.f32 0.0, %v497
    %v499 = vpop.f32.mrb[0].mxu0
    %500 = vdwg.mxu0
    %vm501 = vcmask 254976
    %502 = vst.msk [vmem:[#allocation10] sm:$0x3] %vm501, %v498
    // Predicated region
    $region46: #{tpu_custom_call.1} parent=1 // pred_check
      _
    $region47: #{tpu_custom_call.1} parent=1 // pred_check_branch
      %504 = sbr.rel (0) target = $region49
    $region48: #{tpu_custom_call.1} parent=1 // pred_region
      %s506 = ssub.s32 32, 32
      %507 = vsyncadd [#allocation4], %s506
      %s509 = sshll.u32 [#allocation10], 4
      %s510 = int_to_ptr.vmem [resolvable:$true] %s509
      %512 = dma.vmem_to_hbm [thread:$0]  %s510, 32, %s7, [#allocation4]
    $region49: #{tpu_custom_call.1} parent=1 // pred_fallthru
      _
    // Predicated region
    $region50: #{tpu_custom_call.1} parent=1 // pred_check
      _
    $region51: #{tpu_custom_call.1} parent=1 // pred_check_branch
      %514 = sbr.rel (0) target = $region53
    $region52: #{tpu_custom_call.1} parent=1 // pred_region
      %515 = dma.done [#allocation4], 32
    $region53: #{tpu_custom_call.1} parent=1 // pred_fallthru
      _
    %516 = vsyncpa [#allocation3], 1
    %517 = vsyncpa [#allocation6], 1
    %518 = vsyncpa [#allocation9], 1
    %519 = vsyncpa [#allocation4], 1

</llo_original>
